<compile_context>
chip_gen: v6e
topology: v6e:2x2x1
jax: 0.10.0
libtpu: 0.0.40
codegen_flags: <defaults>
</compile_context>

<pallas_src>
import jax
import jax.numpy as jnp
from jax.experimental import pallas as pl
from jax.experimental.pallas import tpu as pltpu

# Padded layer widths (100->128, 50->128, 200->256, 2->128).
H1, H2, H3, OUT = 128, 128, 256, 128


def mlp_kernel(x_ref, w1_ref, b1_ref, w2_ref, b2_ref,
               w3_ref, b3_ref, w4_ref, b4_ref, o_ref):
    """Whole 4-layer MLP per batch tile: MXU matmuls, EUP exp + approx-recip sigmoid."""

    def sigmoid(z):
        # exp and approx reciprocal both go to the EUP slot (idle between matmuls),
        # avoiding a full-precision VALU divide.
        return pl.reciprocal(1.0 + jnp.exp(-z), approx=True)

    mm_dtype = w1_ref.dtype                      # f32 default; bf16 if requested
    x = x_ref[...].astype(mm_dtype)
    h = sigmoid(jnp.dot(x, w1_ref[...],
                        preferred_element_type=jnp.float32) + b1_ref[...])
    h = sigmoid(jnp.dot(h.astype(mm_dtype), w2_ref[...],
                        preferred_element_type=jnp.float32) + b2_ref[...])
    h = sigmoid(jnp.dot(h.astype(mm_dtype), w3_ref[...],
                        preferred_element_type=jnp.float32) + b3_ref[...])
    h = sigmoid(jnp.dot(h.astype(mm_dtype), w4_ref[...],
                        preferred_element_type=jnp.float32) + b4_ref[...])
    o_ref[...] = h.astype(o_ref.dtype)


def _round_up(x, m):
    return ((x + m - 1) // m) * m


def _pad2d(a, rows, cols):
    return jnp.pad(a, ((0, rows - a.shape[0]), (0, cols - a.shape[1])))


def prepare_params(params, *, matmul_dtype=jnp.float32):
    """One-time padding (+ optional bf16 cast) of Net weights/biases for the kernel.

    Run once; reuse the result across forward calls so no per-call pad ops remain.
    Zero padding is exact in bf16, so the padded-column correctness argument holds.
    """
    (w1, b1, w2, b2, w3, b3, w4, b4) = params
    d = w1.shape[0]
    DP = _round_up(d, 128)
    wd = matmul_dtype
    return (
        _pad2d(w1, DP, H1).astype(wd),  _pad2d(b1, 1, H1).astype(jnp.float32),
        _pad2d(w2, H1, H2).astype(wd),  _pad2d(b2, 1, H2).astype(jnp.float32),
        _pad2d(w3, H2, H3).astype(wd),  _pad2d(b3, 1, H3).astype(jnp.float32),
        _pad2d(w4, H3, OUT).astype(wd), _pad2d(b4, 1, OUT).astype(jnp.float32),
    )


def _vmem_capacity_bytes():
    try:
        return int(pltpu.get_tpu_info().vmem_capacity_bytes)
    except Exception:
        return 64 << 20   # conservative fallback (v7x per-TC VMEM)


def _pick_tile_and_vmem(B, DP, batch_tile, weight_bytes, x_itemsize):
    """Choose the batch tile (multiple of 8) and an explicit VMEM limit."""
    Bp8 = _round_up(B, 8)
    tile = max(8, min(_round_up(batch_tile, 8), Bp8))
    # >= 2 parallel grid steps when the batch is non-trivial so v7x's second
    # TensorCore gets work; harmless extra step overhead on 1-TC chips.
    if Bp8 >= 16:
        tile = min(tile, _round_up(pl.cdiv(Bp8, 2), 8))

    def vmem_need(t):
        io = 2 * t * DP * x_itemsize + 2 * t * OUT * 4   # double-buffered x / out tiles
        act = t * (H1 + H2 + H3 + OUT) * 4               # live f32 activations
        return 2 * weight_bytes + io + act               # resident (buffered) weights + io

    cap = _vmem_capacity_bytes()
    budget = int(cap * 0.6)                              # leave headroom, esp. v7x (64 MiB)
    while tile > 8 and vmem_need(tile) > budget:
        tile = max(8, _round_up(tile // 2, 8))
    # TODO(synk): if d (hence DP) grows to multi-K so even tile=8 overflows, add a
    # K-reduction grid axis over DP for layer 1 (arbitrary semantics + f32 accumulator).

    vmem_limit = min(cap, max(32 << 20, vmem_need(tile) + (8 << 20)))
    return tile, vmem_limit


def net_forward(x, padded_params, *, batch_tile=1024):
    """Pallas forward pass of Net. x: (B, d) float32, padded_params from prepare_params().
    Returns (B, 2) float32."""
    (w1p, b1p, w2p, b2p, w3p, b3p, w4p, b4p) = padded_params
    B, d = x.shape
    DP = w1p.shape[0]
    assert DP == _round_up(d, 128), "padded_params do not match x feature dim"

    weight_bytes = sum(int(a.size) * a.dtype.itemsize for a in padded_params)
    tile, vmem_limit = _pick_tile_and_vmem(B, DP, batch_tile, weight_bytes,
                                           x.dtype.itemsize)

    Bp = _round_up(B, tile)
    xp = _pad2d(x, Bp, DP)            # only per-call padding left: the activations
    grid = (Bp // tile,)

    def full_spec(arr):
        # Constant block index across the grid => VMEM-resident, no per-step re-DMA.
        return pl.BlockSpec(arr.shape, lambda i, _nd=arr.ndim: (0,) * _nd)

    cost = pl.CostEstimate(
        flops=2 * Bp * (DP * H1 + H1 * H2 + H2 * H3 + H3 * OUT),
        transcendentals=Bp * (H1 + H2 + H3 + OUT),
        bytes_accessed=xp.size * xp.dtype.itemsize + 4 * Bp * OUT + weight_bytes,
    )

    out_padded = pl.pallas_call(
        mlp_kernel,
        out_shape=jax.ShapeDtypeStruct((Bp, OUT), jnp.float32),
        grid_spec=pltpu.PrefetchScalarGridSpec(
            num_scalar_prefetch=0,
            grid=grid,
            in_specs=[
                pl.BlockSpec((tile, DP), lambda i: (i, 0)),   # x tile
                full_spec(w1p), full_spec(b1p),
                full_spec(w2p), full_spec(b2p),
                full_spec(w3p), full_spec(b3p),
                full_spec(w4p), full_spec(b4p),
            ],
            out_specs=pl.BlockSpec((tile, OUT), lambda i: (i, 0)),
        ),
        compiler_params=pltpu.CompilerParams(
            dimension_semantics=("parallel",),
            vmem_limit_bytes=vmem_limit),
        cost_estimate=cost,
    )(xp, w1p, b1p, w2p, b2p, w3p, b3p, w4p, b4p)

    # Drop batch padding and the lane-padding of the 2-wide output.
    # TODO(synk): for HBM-write-bound large-B cases, emit a lane-dense (2, Bp) transposed
    # result instead of the 128-lane-padded store; for small B the padded store is lane-dense
    # and cheapest.
    return out_padded[:B, :2]


def init_params(key, d):
    """Deterministic init mimicking PyTorch nn.Linear default (U[-1/sqrt(fan_in), +])."""
    dims = [(d, 100), (100, 50), (50, 200), (200, 2)]
    params = []
    for (fan_in, fan_out) in dims:
        key, kw, kb = jax.random.split(key, 3)
        bound = 1.0 / jnp.sqrt(fan_in)
        w = jax.random.uniform(kw, (fan_in, fan_out), jnp.float32, -bound, bound)
        b = jax.random.uniform(kb, (1, fan_out), jnp.float32, -bound, bound)
        params += [w, b]
    return tuple(params)


def net_forward_ref(x, params):
    (w1, b1, w2, b2, w3, b3, w4, b4) = params
    h = jax.nn.sigmoid(x @ w1 + b1)
    h = jax.nn.sigmoid(h @ w2 + b2)
    h = jax.nn.sigmoid(h @ w3 + b3)
    h = jax.nn.sigmoid(h @ w4 + b4)
    return h


if __name__ == "__main__":
    key = jax.random.PRNGKey(0)
    d = 32
    B = 16
    kx, kp = jax.random.split(key)
    x = jax.random.normal(kx, (B, d), jnp.float32)
    params = init_params(kp, d)

    # One-time parameter prep (padding hoisted out of the per-call path).
    # Use matmul_dtype=jnp.bfloat16 on v6e/v7x for MXU-native throughput when tolerance allows.
    padded_params = prepare_params(params, matmul_dtype=jnp.float32)

    out = net_forward(x, padded_params, batch_tile=1024)
    out = jax.block_until_ready(out)

    ref = net_forward_ref(x, params)
    assert out.shape == (B, 2)
    # Tolerance loosened slightly vs. 1e-5 because sigmoid uses the EUP approx reciprocal.
    assert jnp.allclose(out, ref, atol=2e-3, rtol=2e-3), "mismatch vs JAX reference"

    print("KERNEL_OK")
</pallas_src>

<mosaic_0001>
module attributes {stable_mosaic.version = 11 : i64} {
  func.func @mlp_kernel(%arg0: i32, %arg1: memref<8x128xf32, #tpu.memory_space<vmem>>, %arg2: memref<128x128xf32, #tpu.memory_space<vmem>>, %arg3: memref<1x128xf32, #tpu.memory_space<vmem>>, %arg4: memref<128x128xf32, #tpu.memory_space<vmem>>, %arg5: memref<1x128xf32, #tpu.memory_space<vmem>>, %arg6: memref<128x256xf32, #tpu.memory_space<vmem>>, %arg7: memref<1x256xf32, #tpu.memory_space<vmem>>, %arg8: memref<256x128xf32, #tpu.memory_space<vmem>>, %arg9: memref<1x128xf32, #tpu.memory_space<vmem>>, %arg10: memref<8x128xf32, #tpu.memory_space<vmem>>) attributes {dimension_semantics = [#tpu.dimension_semantics<parallel>], iteration_bounds = array<i64: 2>, scalar_prefetch = 0 : i64, scratch_operands = 0 : i64, tpu.core_type = #tpu.core_type<tc>, window_params = [{transform_indices = @transform_0, window_bounds = array<i64: 8, 128>}, {pipeline_mode = #tpu.pipeline_mode<synchronous>, transform_indices = @transform_1, window_bounds = array<i64: 128, 128>}, {pipeline_mode = #tpu.pipeline_mode<synchronous>, transform_indices = @transform_2, window_bounds = array<i64: 1, 128>}, {pipeline_mode = #tpu.pipeline_mode<synchronous>, transform_indices = @transform_3, window_bounds = array<i64: 128, 128>}, {pipeline_mode = #tpu.pipeline_mode<synchronous>, transform_indices = @transform_4, window_bounds = array<i64: 1, 128>}, {pipeline_mode = #tpu.pipeline_mode<synchronous>, transform_indices = @transform_5, window_bounds = array<i64: 128, 256>}, {pipeline_mode = #tpu.pipeline_mode<synchronous>, transform_indices = @transform_6, window_bounds = array<i64: 1, 256>}, {pipeline_mode = #tpu.pipeline_mode<synchronous>, transform_indices = @transform_7, window_bounds = array<i64: 256, 128>}, {pipeline_mode = #tpu.pipeline_mode<synchronous>, transform_indices = @transform_8, window_bounds = array<i64: 1, 128>}, {transform_indices = @transform_9, window_bounds = array<i64: 8, 128>}]} {
    %c0 = arith.constant 0 : index
    %c0_0 = arith.constant 0 : index
    %0 = vector.load %arg1[%c0, %c0_0] : memref<8x128xf32, #tpu.memory_space<vmem>>, vector<8x128xf32>
    %c0_1 = arith.constant 0 : index
    %c0_2 = arith.constant 0 : index
    %1 = vector.load %arg2[%c0_1, %c0_2] : memref<128x128xf32, #tpu.memory_space<vmem>>, vector<128x128xf32>
    %cst = arith.constant dense<0.000000e+00> : vector<8x128xf32>
    %2 = tpu.matmul %0, %1, %cst {dimension_numbers = #tpu.dot_dimension_numbers<[1], [0], [0], [1], [0, 0, 1, 1], [], []>} : vector<8x128xf32>, vector<128x128xf32>, vector<8x128xf32> -> vector<8x128xf32>
    %c0_3 = arith.constant 0 : index
    %c0_4 = arith.constant 0 : index
    %3 = vector.load %arg3[%c0_3, %c0_4] : memref<1x128xf32, #tpu.memory_space<vmem>>, vector<1x128xf32>
    %4 = vector.broadcast %3 : vector<1x128xf32> to vector<8x128xf32>
    %5 = arith.addf %2, %4 : vector<8x128xf32>
    %cst_5 = arith.constant 0.000000e+00 : f32
    %6 = vector.broadcast %cst_5 : f32 to vector<8x128xf32>
    %7 = arith.subf %6, %5 : vector<8x128xf32>
    %8 = math.exp %7 : vector<8x128xf32>
    %cst_6 = arith.constant 1.000000e+00 : f32
    %9 = vector.broadcast %cst_6 : f32 to vector<8x128xf32>
    %10 = arith.addf %9, %8 : vector<8x128xf32>
    %11 = tpu.reciprocal %10 {approx = true} : vector<8x128xf32> -> vector<8x128xf32>
    %c0_7 = arith.constant 0 : index
    %c0_8 = arith.constant 0 : index
    %12 = vector.load %arg4[%c0_7, %c0_8] : memref<128x128xf32, #tpu.memory_space<vmem>>, vector<128x128xf32>
    %cst_9 = arith.constant dense<0.000000e+00> : vector<8x128xf32>
    %13 = tpu.matmul %11, %12, %cst_9 {dimension_numbers = #tpu.dot_dimension_numbers<[1], [0], [0], [1], [0, 0, 1, 1], [], []>} : vector<8x128xf32>, vector<128x128xf32>, vector<8x128xf32> -> vector<8x128xf32>
    %c0_10 = arith.constant 0 : index
    %c0_11 = arith.constant 0 : index
    %14 = vector.load %arg5[%c0_10, %c0_11] : memref<1x128xf32, #tpu.memory_space<vmem>>, vector<1x128xf32>
    %15 = vector.broadcast %14 : vector<1x128xf32> to vector<8x128xf32>
    %16 = arith.addf %13, %15 : vector<8x128xf32>
    %cst_12 = arith.constant 0.000000e+00 : f32
    %17 = vector.broadcast %cst_12 : f32 to vector<8x128xf32>
    %18 = arith.subf %17, %16 : vector<8x128xf32>
    %19 = math.exp %18 : vector<8x128xf32>
    %cst_13 = arith.constant 1.000000e+00 : f32
    %20 = vector.broadcast %cst_13 : f32 to vector<8x128xf32>
    %21 = arith.addf %20, %19 : vector<8x128xf32>
    %22 = tpu.reciprocal %21 {approx = true} : vector<8x128xf32> -> vector<8x128xf32>
    %c0_14 = arith.constant 0 : index
    %c0_15 = arith.constant 0 : index
    %23 = vector.load %arg6[%c0_14, %c0_15] : memref<128x256xf32, #tpu.memory_space<vmem>>, vector<128x256xf32>
    %cst_16 = arith.constant dense<0.000000e+00> : vector<8x256xf32>
    %24 = tpu.matmul %22, %23, %cst_16 {dimension_numbers = #tpu.dot_dimension_numbers<[1], [0], [0], [1], [0, 0, 1, 1], [], []>} : vector<8x128xf32>, vector<128x256xf32>, vector<8x256xf32> -> vector<8x256xf32>
    %c0_17 = arith.constant 0 : index
    %c0_18 = arith.constant 0 : index
    %25 = vector.load %arg7[%c0_17, %c0_18] : memref<1x256xf32, #tpu.memory_space<vmem>>, vector<1x256xf32>
    %26 = vector.broadcast %25 : vector<1x256xf32> to vector<8x256xf32>
    %27 = arith.addf %24, %26 : vector<8x256xf32>
    %cst_19 = arith.constant 0.000000e+00 : f32
    %28 = vector.broadcast %cst_19 : f32 to vector<8x256xf32>
    %29 = arith.subf %28, %27 : vector<8x256xf32>
    %30 = math.exp %29 : vector<8x256xf32>
    %cst_20 = arith.constant 1.000000e+00 : f32
    %31 = vector.broadcast %cst_20 : f32 to vector<8x256xf32>
    %32 = arith.addf %31, %30 : vector<8x256xf32>
    %33 = tpu.reciprocal %32 {approx = true} : vector<8x256xf32> -> vector<8x256xf32>
    %c0_21 = arith.constant 0 : index
    %c0_22 = arith.constant 0 : index
    %34 = vector.load %arg8[%c0_21, %c0_22] : memref<256x128xf32, #tpu.memory_space<vmem>>, vector<256x128xf32>
    %cst_23 = arith.constant dense<0.000000e+00> : vector<8x128xf32>
    %35 = tpu.matmul %33, %34, %cst_23 {dimension_numbers = #tpu.dot_dimension_numbers<[1], [0], [0], [1], [0, 0, 1, 1], [], []>} : vector<8x256xf32>, vector<256x128xf32>, vector<8x128xf32> -> vector<8x128xf32>
    %c0_24 = arith.constant 0 : index
    %c0_25 = arith.constant 0 : index
    %36 = vector.load %arg9[%c0_24, %c0_25] : memref<1x128xf32, #tpu.memory_space<vmem>>, vector<1x128xf32>
    %37 = vector.broadcast %36 : vector<1x128xf32> to vector<8x128xf32>
    %38 = arith.addf %35, %37 : vector<8x128xf32>
    %cst_26 = arith.constant 0.000000e+00 : f32
    %39 = vector.broadcast %cst_26 : f32 to vector<8x128xf32>
    %40 = arith.subf %39, %38 : vector<8x128xf32>
    %41 = math.exp %40 : vector<8x128xf32>
    %cst_27 = arith.constant 1.000000e+00 : f32
    %42 = vector.broadcast %cst_27 : f32 to vector<8x128xf32>
    %43 = arith.addf %42, %41 : vector<8x128xf32>
    %44 = tpu.reciprocal %43 {approx = true} : vector<8x128xf32> -> vector<8x128xf32>
    %c0_28 = arith.constant 0 : index
    %c0_29 = arith.constant 0 : index
    %45 = vector.load %arg10[%c0_28, %c0_29] : memref<8x128xf32, #tpu.memory_space<vmem>>, vector<8x128xf32>
    tpu.vector_store %arg10[%c0_28, %c0_29], %44 {strides = array<i32>} : memref<8x128xf32, #tpu.memory_space<vmem>>, vector<8x128xf32>,
    return
  }
  func.func @transform_0(%arg0: i32) -> (i32, i32) {
    %c0_i32 = arith.constant 0 : i32
    %c0_i32_0 = arith.constant 0 : i32
    return %arg0, %c0_i32 : i32, i32
  }
  func.func @transform_1(%arg0: i32) -> (i32, i32) {
    %c0_i32 = arith.constant 0 : i32
    %c0_i32_0 = arith.constant 0 : i32
    %c0_i32_1 = arith.constant 0 : i32
    return %c0_i32, %c0_i32_0 : i32, i32
  }
  func.func @transform_2(%arg0: i32) -> (i32, i32) {
    %c0_i32 = arith.constant 0 : i32
    %c0_i32_0 = arith.constant 0 : i32
    %c0_i32_1 = arith.constant 0 : i32
    return %c0_i32, %c0_i32_0 : i32, i32
  }
  func.func @transform_3(%arg0: i32) -> (i32, i32) {
    %c0_i32 = arith.constant 0 : i32
    %c0_i32_0 = arith.constant 0 : i32
    %c0_i32_1 = arith.constant 0 : i32
    return %c0_i32, %c0_i32_0 : i32, i32
  }
  func.func @transform_4(%arg0: i32) -> (i32, i32) {
    %c0_i32 = arith.constant 0 : i32
    %c0_i32_0 = arith.constant 0 : i32
    %c0_i32_1 = arith.constant 0 : i32
    return %c0_i32, %c0_i32_0 : i32, i32
  }
  func.func @transform_5(%arg0: i32) -> (i32, i32) {
    %c0_i32 = arith.constant 0 : i32
    %c0_i32_0 = arith.constant 0 : i32
    %c0_i32_1 = arith.constant 0 : i32
    return %c0_i32, %c0_i32_0 : i32, i32
  }
  func.func @transform_6(%arg0: i32) -> (i32, i32) {
    %c0_i32 = arith.constant 0 : i32
    %c0_i32_0 = arith.constant 0 : i32
    %c0_i32_1 = arith.constant 0 : i32
    return %c0_i32, %c0_i32_0 : i32, i32
  }
  func.func @transform_7(%arg0: i32) -> (i32, i32) {
    %c0_i32 = arith.constant 0 : i32
    %c0_i32_0 = arith.constant 0 : i32
    %c0_i32_1 = arith.constant 0 : i32
    return %c0_i32, %c0_i32_0 : i32, i32
  }
  func.func @transform_8(%arg0: i32) -> (i32, i32) {
    %c0_i32 = arith.constant 0 : i32
    %c0_i32_0 = arith.constant 0 : i32
    %c0_i32_1 = arith.constant 0 : i32
    return %c0_i32, %c0_i32_0 : i32, i32
  }
  func.func @transform_9(%arg0: i32) -> (i32, i32) {
    %c0_i32 = arith.constant 0 : i32
    %c0_i32_0 = arith.constant 0 : i32
    return %arg0, %c0_i32 : i32, i32
  }
}

</mosaic_0001>

<llo_original>
// kernel: tpu_custom_call.1
$region0: #{tpu_custom_call.1}
  #allocation0 [shape = 'u32[]', space=smem, size = 0x4, offset = 0x4, fixed_abs, tag = 'smem constant byte address 0x4 - core index']
  #allocation1 [shape = 'u32[144,128]{1,0:T(1,128)}', space=vmem, size = 0x12000, scoped, tag = 'internal scratch']
  %s0 = inlined_call_operand.hbm [shape: f32[16,128], index: 0, kind: input, shape index: {}]
  %s1 = inlined_call_operand.hbm [shape: f32[128,128], index: 1, kind: input, shape index: {}]
  %s2 = inlined_call_operand.vmem [shape: f32[1,128], index: 2, kind: input, shape index: {}]
  %s3 = inlined_call_operand.hbm [shape: f32[128,128], index: 3, kind: input, shape index: {}]
  %s4 = inlined_call_operand.vmem [shape: f32[1,128], index: 4, kind: input, shape index: {}]
  %s5 = inlined_call_operand.hbm [shape: f32[128,256], index: 5, kind: input, shape index: {}]
  %s6 = inlined_call_operand.vmem [shape: f32[1,256], index: 6, kind: input, shape index: {}]
  %s7 = inlined_call_operand.hbm [shape: f32[256,128], index: 7, kind: input, shape index: {}]
  %s8 = inlined_call_operand.vmem [shape: f32[1,128], index: 8, kind: input, shape index: {}]
  %s9 = inlined_call_operand.hbm [shape: f32[16,128], index: 9, kind: output, shape index: {}]
  %s10 = sld [smem:[#allocation0]]
  $region89: #{tpu_custom_call.1} parent=0
    _
  %s12 = ssub.s32 1, %s10
  %s13 = scalar_select 0, %s12, %s10
  $region1: #{tpu_custom_call.1} parent=0
    #allocation2 [shape = 'u8[8192]{0}', space=vmem, size = 0x2000, scoped, tag = 'input window, operand 0']
    #allocation3 [shape = 's32[2]{0}', space=sflag, size = 0x8, scoped, tag = 'scoped memory for tpu_custom_call.1']
    #allocation4 [shape = 's32[2]{0}', space=sflag, size = 0x8, scoped, tag = 'scoped memory for tpu_custom_call.1']
    #allocation5 [shape = 'u8[65536]{0}', space=vmem, size = 0x10000, scoped, tag = 'input window, operand 1, single buffered']
    #allocation6 [shape = 's32[1]{0}', space=sflag, size = 0x4, scoped, tag = 'scoped memory for tpu_custom_call.1']
    #allocation7 [shape = 'u8[65536]{0}', space=vmem, size = 0x10000, scoped, tag = 'input window, operand 3, single buffered']
    #allocation8 [shape = 'u8[131072]{0}', space=vmem, size = 0x20000, scoped, tag = 'input window, operand 5, single buffered']
    #allocation9 [shape = 's32[1]{0}', space=sflag, size = 0x4, scoped, tag = 'scoped memory for tpu_custom_call.1']
    #allocation10 [shape = 'u8[131072]{0}', space=vmem, size = 0x20000, scoped, tag = 'input window, operand 7, single buffered']
    #allocation11 [shape = 'u8[8192]{0}', space=vmem, size = 0x2000, scoped, tag = 'output window, operand 0']
    %14 = vsyncpa [#allocation3], 0
    %s15 = scalar_lea.sflag [#allocation3], 1
    %16 = vsyncpa %s15, 0
    %17 = vsyncpa [#allocation6], 0
    %18 = vsyncpa [#allocation9], 0
    %19 = vsyncpa [#allocation4], 0
    %s20 = scalar_lea.sflag [#allocation4], 1
    %21 = vsyncpa %s20, 0
    loop: start=0, step=1, limit=4
    $region2: #{tpu_custom_call.1} parent=1 // loop_pre_header
      _
    $region3: #{tpu_custom_call.1} parent=1 // loop_header
      %s23 = sphi 0, %s27
      %p24 = scmp.ge.s32.totalorder %s23, 4
      %s33 = sphi 0, %s35
      %s36 = sphi 0, %s33
      %s37 = sphi 0, %s36
      %s53 = sphi 0, %s37
      %s57 = sphi 0, %s57
      %s59 = sphi 0, %s57
      %s60 = sphi 0, %s59
      %s74 = sphi 0, %s60
      %s78 = sphi 0, %s78
      %s80 = sphi 0, %s78
      %s81 = sphi 0, %s80
      %s95 = sphi 0, %s81
      %s99 = sphi 0, %s99
      %s101 = sphi 0, %s99
      %s102 = sphi 0, %s101
      %s116 = sphi 0, %s102
      %s120 = sphi 0, %s120
      %s122 = sphi 0, %s120
      %s123 = sphi 0, %s122
      %s137 = sphi 0, %s123
      %s141 = sphi 0, %s141
      %s143 = sphi 0, %s141
      %s144 = sphi 0, %s143
      %s158 = sphi 0, %s144
      %s162 = sphi 0, %s162
      %s164 = sphi 0, %s162
      %s165 = sphi 0, %s164
      %s179 = sphi 0, %s165
      %s183 = sphi 0, %s183
      %s185 = sphi 0, %s183
      %s186 = sphi 0, %s185
      %s200 = sphi 0, %s186
      %s204 = sphi 0, %s204
      %s206 = sphi 0, %s204
      %s207 = sphi 0, %s206
      %s221 = sphi 0, %s207
      %s227 = sphi 0, %s229
      %s230 = sphi 0, %s227
      %s231 = sphi 0, %s230
      %s247 = sphi 0, %s231
    $region4: #{tpu_custom_call.1} parent=1 // loop_header_branch
      %26 = sbr.rel (%p24) target = $region8
    $region5: #{tpu_custom_call.1} parent=1 // loop_body
      %s28 = ssub.s32 %s23, 1
      %s29 = ssub.s32 %s23, 2
      %s30 = sadd.s32 %s23, 1
      %s31 = ssub.s32 %s23, %s30
      %p32 = scmp.eq.s32.totalorder %s31, 0
      %s34 = sadd.s32 %s33, 1
      %s35 = scalar_select %p32, %s33, %s34
      %p38 = pneg %p32
      %p39 = scmp.eq.s32.totalorder %s23, 1
      %p40 = por %p38, %p39
      %p41 = scmp.ne.s32.totalorder %s33, %s36
      %p42 = scmp.eq.s32.totalorder %s23, 0
      %p43 = por %p41, %p42
      %p44 = scmp.ne.s32.totalorder %s33, %s36
      %p45 = scmp.eq.s32.totalorder %s28, 1
      %p46 = por %p44, %p45
      %p47 = scmp.ne.s32.totalorder %s36, %s37
      %p48 = scmp.eq.s32.totalorder %s28, 0
      %p49 = por %p47, %p48
      %p50 = scmp.ne.s32.totalorder %s36, %s37
      %p51 = scmp.eq.s32.totalorder %s29, 1
      %p52 = por %p50, %p51
      %p54 = scmp.ne.s32.totalorder %s37, %s53
      %p55 = scmp.eq.s32.totalorder %s29, 0
      %p56 = por %p54, %p55
      %s58 = sadd.s32 %s57, 1
      %p61 = scmp.eq.s32.totalorder %s23, 1
      %p62 = scmp.ne.s32.totalorder %s57, %s59
      %p63 = scmp.eq.s32.totalorder %s23, 0
      %p64 = por %p62, %p63
      %p65 = scmp.ne.s32.totalorder %s57, %s59
      %p66 = scmp.eq.s32.totalorder %s28, 1
      %p67 = por %p65, %p66
      %p68 = scmp.ne.s32.totalorder %s59, %s60
      %p69 = scmp.eq.s32.totalorder %s28, 0
      %p70 = por %p68, %p69
      %p71 = scmp.ne.s32.totalorder %s59, %s60
      %p72 = scmp.eq.s32.totalorder %s29, 1
      %p73 = por %p71, %p72
      %p75 = scmp.ne.s32.totalorder %s60, %s74
      %p76 = scmp.eq.s32.totalorder %s29, 0
      %p77 = por %p75, %p76
      %s79 = sadd.s32 %s78, 1
      %p82 = scmp.eq.s32.totalorder %s23, 1
      %p83 = scmp.ne.s32.totalorder %s78, %s80
      %p84 = scmp.eq.s32.totalorder %s23, 0
      %p85 = por %p83, %p84
      %p86 = scmp.ne.s32.totalorder %s78, %s80
      %p87 = scmp.eq.s32.totalorder %s28, 1
      %p88 = por %p86, %p87
      %p89 = scmp.ne.s32.totalorder %s80, %s81
      %p90 = scmp.eq.s32.totalorder %s28, 0
      %p91 = por %p89, %p90
      %p92 = scmp.ne.s32.totalorder %s80, %s81
      %p93 = scmp.eq.s32.totalorder %s29, 1
      %p94 = por %p92, %p93
      %p96 = scmp.ne.s32.totalorder %s81, %s95
      %p97 = scmp.eq.s32.totalorder %s29, 0
      %p98 = por %p96, %p97
      %s100 = sadd.s32 %s99, 1
      %p103 = scmp.eq.s32.totalorder %s23, 1
      %p104 = scmp.ne.s32.totalorder %s99, %s101
      %p105 = scmp.eq.s32.totalorder %s23, 0
      %p106 = por %p104, %p105
      %p107 = scmp.ne.s32.totalorder %s99, %s101
      %p108 = scmp.eq.s32.totalorder %s28, 1
      %p109 = por %p107, %p108
      %p110 = scmp.ne.s32.totalorder %s101, %s102
      %p111 = scmp.eq.s32.totalorder %s28, 0
      %p112 = por %p110, %p111
      %p113 = scmp.ne.s32.totalorder %s101, %s102
      %p114 = scmp.eq.s32.totalorder %s29, 1
      %p115 = por %p113, %p114
      %p117 = scmp.ne.s32.totalorder %s102, %s116
      %p118 = scmp.eq.s32.totalorder %s29, 0
      %p119 = por %p117, %p118
      %s121 = sadd.s32 %s120, 1
      %p124 = scmp.eq.s32.totalorder %s23, 1
      %p125 = scmp.ne.s32.totalorder %s120, %s122
      %p126 = scmp.eq.s32.totalorder %s23, 0
      %p127 = por %p125, %p126
      %p128 = scmp.ne.s32.totalorder %s120, %s122
      %p129 = scmp.eq.s32.totalorder %s28, 1
      %p130 = por %p128, %p129
      %p131 = scmp.ne.s32.totalorder %s122, %s123
      %p132 = scmp.eq.s32.totalorder %s28, 0
      %p133 = por %p131, %p132
      %p134 = scmp.ne.s32.totalorder %s122, %s123
      %p135 = scmp.eq.s32.totalorder %s29, 1
      %p136 = por %p134, %p135
      %p138 = scmp.ne.s32.totalorder %s123, %s137
      %p139 = scmp.eq.s32.totalorder %s29, 0
      %p140 = por %p138, %p139
      %s142 = sadd.s32 %s141, 1
      %p145 = scmp.eq.s32.totalorder %s23, 1
      %p146 = scmp.ne.s32.totalorder %s141, %s143
      %p147 = scmp.eq.s32.totalorder %s23, 0
      %p148 = por %p146, %p147
      %p149 = scmp.ne.s32.totalorder %s141, %s143
      %p150 = scmp.eq.s32.totalorder %s28, 1
      %p151 = por %p149, %p150
      %p152 = scmp.ne.s32.totalorder %s143, %s144
      %p153 = scmp.eq.s32.totalorder %s28, 0
      %p154 = por %p152, %p153
      %p155 = scmp.ne.s32.totalorder %s143, %s144
      %p156 = scmp.eq.s32.totalorder %s29, 1
      %p157 = por %p155, %p156
      %p159 = scmp.ne.s32.totalorder %s144, %s158
      %p160 = scmp.eq.s32.totalorder %s29, 0
      %p161 = por %p159, %p160
      %s163 = sadd.s32 %s162, 1
      %p166 = scmp.eq.s32.totalorder %s23, 1
      %p167 = scmp.ne.s32.totalorder %s162, %s164
      %p168 = scmp.eq.s32.totalorder %s23, 0
      %p169 = por %p167, %p168
      %p170 = scmp.ne.s32.totalorder %s162, %s164
      %p171 = scmp.eq.s32.totalorder %s28, 1
      %p172 = por %p170, %p171
      %p173 = scmp.ne.s32.totalorder %s164, %s165
      %p174 = scmp.eq.s32.totalorder %s28, 0
      %p175 = por %p173, %p174
      %p176 = scmp.ne.s32.totalorder %s164, %s165
      %p177 = scmp.eq.s32.totalorder %s29, 1
      %p178 = por %p176, %p177
      %p180 = scmp.ne.s32.totalorder %s165, %s179
      %p181 = scmp.eq.s32.totalorder %s29, 0
      %p182 = por %p180, %p181
      %s184 = sadd.s32 %s183, 1
      %p187 = scmp.eq.s32.totalorder %s23, 1
      %p188 = scmp.ne.s32.totalorder %s183, %s185
      %p189 = scmp.eq.s32.totalorder %s23, 0
      %p190 = por %p188, %p189
      %p191 = scmp.ne.s32.totalorder %s183, %s185
      %p192 = scmp.eq.s32.totalorder %s28, 1
      %p193 = por %p191, %p192
      %p194 = scmp.ne.s32.totalorder %s185, %s186
      %p195 = scmp.eq.s32.totalorder %s28, 0
      %p196 = por %p194, %p195
      %p197 = scmp.ne.s32.totalorder %s185, %s186
      %p198 = scmp.eq.s32.totalorder %s29, 1
      %p199 = por %p197, %p198
      %p201 = scmp.ne.s32.totalorder %s186, %s200
      %p202 = scmp.eq.s32.totalorder %s29, 0
      %p203 = por %p201, %p202
      %s205 = sadd.s32 %s204, 1
      %p208 = scmp.eq.s32.totalorder %s23, 1
      %p209 = scmp.ne.s32.totalorder %s204, %s206
      %p210 = scmp.eq.s32.totalorder %s23, 0
      %p211 = por %p209, %p210
      %p212 = scmp.ne.s32.totalorder %s204, %s206
      %p213 = scmp.eq.s32.totalorder %s28, 1
      %p214 = por %p212, %p213
      %p215 = scmp.ne.s32.totalorder %s206, %s207
      %p216 = scmp.eq.s32.totalorder %s28, 0
      %p217 = por %p215, %p216
      %p218 = scmp.ne.s32.totalorder %s206, %s207
      %p219 = scmp.eq.s32.totalorder %s29, 1
      %p220 = por %p218, %p219
      %p222 = scmp.ne.s32.totalorder %s207, %s221
      %p223 = scmp.eq.s32.totalorder %s29, 0
      %p224 = por %p222, %p223
      %s225 = ssub.s32 %s23, %s30
      %p226 = scmp.eq.s32.totalorder %s225, 0
      %s228 = sadd.s32 %s227, 1
      %s229 = scalar_select %p226, %s227, %s228
      %p232 = pneg %p226
      %p233 = scmp.eq.s32.totalorder %s23, 1
      %p234 = por %p232, %p233
      %p235 = scmp.ne.s32.totalorder %s227, %s230
      %p236 = scmp.eq.s32.totalorder %s23, 0
      %p237 = por %p235, %p236
      %p238 = scmp.ne.s32.totalorder %s227, %s230
      %p239 = scmp.eq.s32.totalorder %s28, 1
      %p240 = por %p238, %p239
      %p241 = scmp.ne.s32.totalorder %s230, %s231
      %p242 = scmp.eq.s32.totalorder %s28, 0
      %p243 = por %p241, %p242
      %p244 = scmp.ne.s32.totalorder %s230, %s231
      %p245 = scmp.eq.s32.totalorder %s29, 1
      %p246 = por %p244, %p245
      %p248 = scmp.ne.s32.totalorder %s231, %s247
      %p249 = scmp.eq.s32.totalorder %s29, 0
      %p250 = por %p248, %p249
      %p251 = scmp.le.s32.totalorder 1, %s23
      %p252 = scmp.lt.s32.totalorder %s23, 3
      %p253 = pnand %p251, %p252
      %p254 = pneg %p253
      // Predicated region
      $region9: #{tpu_custom_call.1} parent=5 // pred_check
        _
      $region10: #{tpu_custom_call.1} parent=5 // pred_check_branch
        %256 = sbr.rel (%p253) target = $region12
      $region11: #{tpu_custom_call.1} parent=5 // pred_region
        %s257 = ssub.s32 %s23, 1
        // Predicated region
        $region13: #{tpu_custom_call.1} parent=11 // pred_check
          %p258 = pneg %p70
        $region14: #{tpu_custom_call.1} parent=11 // pred_check_branch
          %260 = sbr.rel (%p258) target = $region16
        $region15: #{tpu_custom_call.1} parent=11 // pred_region
          %s262 = ssub.s32 2048, 2048
          %263 = vsyncadd [#allocation6], %s262
          %s264 = sshll.u32 [#allocation5], 4
          %s265 = int_to_ptr.vmem [resolvable:$true] %s264
          %270 = dma.hbm_to_vmem [thread:$0]  %s1, 2048, %s265, [#allocation6], 128, 128, 8
        $region16: #{tpu_custom_call.1} parent=11 // pred_fallthru
          _
        // Predicated region
        $region17: #{tpu_custom_call.1} parent=11 // pred_check
          %p271 = pneg %p91
        $region18: #{tpu_custom_call.1} parent=11 // pred_check_branch
          %273 = sbr.rel (%p271) target = $region20
        $region19: #{tpu_custom_call.1} parent=11 // pred_region
          _
        $region20: #{tpu_custom_call.1} parent=11 // pred_fallthru
          _
        // Predicated region
        $region21: #{tpu_custom_call.1} parent=11 // pred_check
          %p274 = pneg %p112
        $region22: #{tpu_custom_call.1} parent=11 // pred_check_branch
          %276 = sbr.rel (%p274) target = $region24
        $region23: #{tpu_custom_call.1} parent=11 // pred_region
          %s278 = ssub.s32 2048, 2048
          %279 = vsyncadd [#allocation6], %s278
          %s280 = sshll.u32 [#allocation7], 4
          %s281 = int_to_ptr.vmem [resolvable:$true] %s280
          %286 = dma.hbm_to_vmem [thread:$0]  %s3, 2048, %s281, [#allocation6], 128, 128, 8
        $region24: #{tpu_custom_call.1} parent=11 // pred_fallthru
          _
        // Predicated region
        $region25: #{tpu_custom_call.1} parent=11 // pred_check
          %p287 = pneg %p133
        $region26: #{tpu_custom_call.1} parent=11 // pred_check_branch
          %289 = sbr.rel (%p287) target = $region28
        $region27: #{tpu_custom_call.1} parent=11 // pred_region
          _
        $region28: #{tpu_custom_call.1} parent=11 // pred_fallthru
          _
        // Predicated region
        $region29: #{tpu_custom_call.1} parent=11 // pred_check
          %p290 = pneg %p154
        $region30: #{tpu_custom_call.1} parent=11 // pred_check_branch
          %292 = sbr.rel (%p290) target = $region32
        $region31: #{tpu_custom_call.1} parent=11 // pred_region
          %s294 = ssub.s32 4096, 4096
          %295 = vsyncadd [#allocation9], %s294
          %s296 = sshll.u32 [#allocation8], 4
          %s297 = int_to_ptr.vmem [resolvable:$true] %s296
          %302 = dma.hbm_to_vmem [thread:$0]  %s5, 4096, %s297, [#allocation9], 256, 256, 16
        $region32: #{tpu_custom_call.1} parent=11 // pred_fallthru
          _
        // Predicated region
        $region33: #{tpu_custom_call.1} parent=11 // pred_check
          %p303 = pneg %p175
        $region34: #{tpu_custom_call.1} parent=11 // pred_check_branch
          %305 = sbr.rel (%p303) target = $region36
        $region35: #{tpu_custom_call.1} parent=11 // pred_region
          _
        $region36: #{tpu_custom_call.1} parent=11 // pred_fallthru
          _
        // Predicated region
        $region37: #{tpu_custom_call.1} parent=11 // pred_check
          %p306 = pneg %p196
        $region38: #{tpu_custom_call.1} parent=11 // pred_check_branch
          %308 = sbr.rel (%p306) target = $region40
        $region39: #{tpu_custom_call.1} parent=11 // pred_region
          %s310 = ssub.s32 4096, 4096
          %311 = vsyncadd [#allocation9], %s310
          %s312 = sshll.u32 [#allocation10], 4
          %s313 = int_to_ptr.vmem [resolvable:$true] %s312
          %318 = dma.hbm_to_vmem [thread:$0]  %s7, 4096, %s313, [#allocation9], 128, 128, 8
        $region40: #{tpu_custom_call.1} parent=11 // pred_fallthru
          _
        // Predicated region
        $region41: #{tpu_custom_call.1} parent=11 // pred_check
          %p319 = pneg %p217
        $region42: #{tpu_custom_call.1} parent=11 // pred_check_branch
          %321 = sbr.rel (%p319) target = $region44
        $region43: #{tpu_custom_call.1} parent=11 // pred_region
          _
        $region44: #{tpu_custom_call.1} parent=11 // pred_fallthru
          _
      $region12: #{tpu_custom_call.1} parent=5 // pred_fallthru
        _
      %p322 = scmp.lt.s32.totalorder %s23, 2
      // Predicated region
      $region45: #{tpu_custom_call.1} parent=5 // pred_check
        %p323 = pneg %p322
      $region46: #{tpu_custom_call.1} parent=5 // pred_check_branch
        %325 = sbr.rel (%p323) target = $region48
      $region47: #{tpu_custom_call.1} parent=5 // pred_region
        // Predicated region
        $region49: #{tpu_custom_call.1} parent=47 // pred_check
          %p326 = pneg %p43
        $region50: #{tpu_custom_call.1} parent=47 // pred_check_branch
          %328 = sbr.rel (%p326) target = $region52
        $region51: #{tpu_custom_call.1} parent=47 // pred_region
          %s329 = sand.u32 %s33, 1
          %s330 = scalar_lea.sflag [#allocation3], %s329
          %s331 = sand.u32 %s33, 1
          %s332 = smul.addr %s331, 8
          %s333 = scalar_lea.vmem [#allocation2], %s332
          %s335 = ssub.s32 128, 128
          %336 = vsyncadd %s330, %s335
          %s337 = smul.addr %s23, 128
          %s338 = scalar_lea.hbm %s0, %s337
          %s340 = sshll.u32 %s333, 4
          %s341 = int_to_ptr.vmem [resolvable:$true] %s340
          %343 = dma.hbm_to_vmem [thread:$0]  %s338, 128, %s341, %s330
        $region52: #{tpu_custom_call.1} parent=47 // pred_fallthru
          _
      $region48: #{tpu_custom_call.1} parent=5 // pred_fallthru
        _
      %p344 = scmp.le.s32.totalorder 1, %s23
      %p345 = scmp.lt.s32.totalorder %s23, 3
      %p346 = pnand %p344, %p345
      %p347 = pneg %p346
      // Predicated region
      $region53: #{tpu_custom_call.1} parent=5 // pred_check
        _
      $region54: #{tpu_custom_call.1} parent=5 // pred_check_branch
        %349 = sbr.rel (%p346) target = $region56
      $region55: #{tpu_custom_call.1} parent=5 // pred_region
        %s350 = ssub.s32 %s23, 1
        %s351 = sand.u32 %s36, 1
        %s352 = scalar_lea.sflag [#allocation3], %s351
        %s353 = sand.u32 %s36, 1
        %s354 = smul.addr %s353, 8
        %s355 = scalar_lea.vmem [#allocation2], %s354
        // Predicated region
        $region57: #{tpu_custom_call.1} parent=55 // pred_check
          %p356 = pneg %p49
        $region58: #{tpu_custom_call.1} parent=55 // pred_check_branch
          %358 = sbr.rel (%p356) target = $region60
        $region59: #{tpu_custom_call.1} parent=55 // pred_region
          %359 = dma.done %s352, 128
        $region60: #{tpu_custom_call.1} parent=55 // pred_fallthru
          _
        // Predicated region
        $region61: #{tpu_custom_call.1} parent=55 // pred_check
          %p360 = pneg %p70
        $region62: #{tpu_custom_call.1} parent=55 // pred_check_branch
          %362 = sbr.rel (%p360) target = $region64
        $region63: #{tpu_custom_call.1} parent=55 // pred_region
          %363 = dma.done [#allocation6], 2048
        $region64: #{tpu_custom_call.1} parent=55 // pred_fallthru
          _
        // Predicated region
        $region65: #{tpu_custom_call.1} parent=55 // pred_check
          %p364 = pneg %p112
        $region66: #{tpu_custom_call.1} parent=55 // pred_check_branch
          %366 = sbr.rel (%p364) target = $region68
        $region67: #{tpu_custom_call.1} parent=55 // pred_region
          %367 = dma.done [#allocation6], 2048
        $region68: #{tpu_custom_call.1} parent=55 // pred_fallthru
          _
        // Predicated region
        $region69: #{tpu_custom_call.1} parent=55 // pred_check
          %p368 = pneg %p154
        $region70: #{tpu_custom_call.1} parent=55 // pred_check_branch
          %370 = sbr.rel (%p368) target = $region72
        $region71: #{tpu_custom_call.1} parent=55 // pred_region
          %371 = dma.done [#allocation9], 4096
        $region72: #{tpu_custom_call.1} parent=55 // pred_fallthru
          _
        // Predicated region
        $region73: #{tpu_custom_call.1} parent=55 // pred_check
          %p372 = pneg %p196
        $region74: #{tpu_custom_call.1} parent=55 // pred_check_branch
          %374 = sbr.rel (%p372) target = $region76
        $region75: #{tpu_custom_call.1} parent=55 // pred_region
          %375 = dma.done [#allocation9], 4096
        $region76: #{tpu_custom_call.1} parent=55 // pred_fallthru
          _
        %s376 = sand.u32 %s36, 1
        %s377 = scalar_lea.sflag [#allocation3], %s376
        %s378 = sand.u32 %s36, 1
        %s379 = smul.addr %s378, 8
        %s380 = scalar_lea.vmem [#allocation2], %s379
        %p381 = pneg %p49
        %p382 = pneg %p46
        %p383 = pneg %p70
        %p384 = pneg %p67
        %p385 = pneg %p91
        %p386 = pneg %p88
        %p387 = pneg %p112
        %p388 = pneg %p109
        %p389 = pneg %p133
        %p390 = pneg %p130
        %p391 = pneg %p154
        %p392 = pneg %p151
        %p393 = pneg %p175
        %p394 = pneg %p172
        %p395 = pneg %p196
        %p396 = pneg %p193
        %p397 = pneg %p217
        %p398 = pneg %p214
        %p399 = pneg %p243
        %p400 = pneg %p240
        %s401 = sand.u32 %s230, 1
        %s402 = scalar_lea.sflag [#allocation4], %s401
        %s403 = sand.u32 %s230, 1
        %s404 = smul.addr %s403, 8
        %s405 = scalar_lea.vmem [#allocation11], %s404
        %v406 = vld [vmem:[%s355] sm:$0xff]
        %v407 = vld [vmem:[#allocation5] sm:$0xff]
        %v408 = vld [vmem:[#allocation5 + $0x8] sm:$0xff]
        %v409 = vld [vmem:[#allocation5 + $0x10] sm:$0xff]
        %v410 = vld [vmem:[#allocation5 + $0x18] sm:$0xff]
        %v411 = vld [vmem:[#allocation5 + $0x20] sm:$0xff]
        %v412 = vld [vmem:[#allocation5 + $0x28] sm:$0xff]
        %v413 = vld [vmem:[#allocation5 + $0x30] sm:$0xff]
        %v414 = vld [vmem:[#allocation5 + $0x38] sm:$0xff]
        %v415 = vld [vmem:[#allocation5 + $0x40] sm:$0xff]
        %v416 = vld [vmem:[#allocation5 + $0x48] sm:$0xff]
        %v417 = vld [vmem:[#allocation5 + $0x50] sm:$0xff]
        %v418 = vld [vmem:[#allocation5 + $0x58] sm:$0xff]
        %v419 = vld [vmem:[#allocation5 + $0x60] sm:$0xff]
        %v420 = vld [vmem:[#allocation5 + $0x68] sm:$0xff]
        %v421 = vld [vmem:[#allocation5 + $0x70] sm:$0xff]
        %v422 = vld [vmem:[#allocation5 + $0x78] sm:$0xff]
        %v423 = vld [vmem:[%s2] sm:$0x1]
        %v425 = vlaneseq
        %v426 = vshrl.u32 %v425, 7
        %v427 = vsub.s32 0, %v426
        %v428 = vrot.slane %v423, %v427
        %430 = vmatprep.subr.mxu0 0.0
        %431 = vmatpush1.msra.mxu0 %v422
        %432 = vmatprep.subr.mxu0 0.0
        %433 = vmatpush1.msra.mxu0 %v421
        %434 = vmatprep.subr.mxu0 0.0
        %435 = vmatpush1.msra.mxu0 %v420
        %436 = vmatprep.subr.mxu0 0.0
        %437 = vmatpush1.msra.mxu0 %v419
        %438 = vmatprep.subr.mxu0 0.0
        %439 = vmatpush1.msra.mxu0 %v418
        %440 = vmatprep.subr.mxu0 0.0
        %441 = vmatpush1.msra.mxu0 %v417
        %442 = vmatprep.subr.mxu0 0.0
        %443 = vmatpush1.msra.mxu0 %v416
        %444 = vmatprep.subr.mxu0 0.0
        %445 = vmatpush1.msra.mxu0 %v415
        %446 = vmatprep.subr.mxu0 0.0
        %447 = vmatpush1.msra.mxu0 %v414
        %448 = vmatprep.subr.mxu0 0.0
        %449 = vmatpush1.msra.mxu0 %v413
        %450 = vmatprep.subr.mxu0 0.0
        %451 = vmatpush1.msra.mxu0 %v412
        %452 = vmatprep.subr.mxu0 0.0
        %453 = vmatpush1.msra.mxu0 %v411
        %454 = vmatprep.subr.mxu0 0.0
        %455 = vmatpush1.msra.mxu0 %v410
        %456 = vmatprep.subr.mxu0 0.0
        %457 = vmatpush1.msra.mxu0 %v409
        %458 = vmatprep.subr.mxu0 0.0
        %459 = vmatpush1.msra.mxu0 %v408
        %460 = vmatprep.subr.mxu0 0.0
        %461 = vmatpush1.msra.mxu0 %v407
        %462 = vmatprep.subr.mxu0 0.0
        %463 = vmatpush2.msra.mxu0 0.0
        %464 = vmatprep.subr.mxu0 0.0
        %465 = vmatpush2.msra.mxu0 0.0
        %466 = vmatprep.subr.mxu0 0.0
        %467 = vmatpush2.msra.mxu0 0.0
        %468 = vmatprep.subr.mxu0 0.0
        %469 = vmatpush2.msra.mxu0 0.0
        %470 = vmatprep.subr.mxu0 0.0
        %471 = vmatpush2.msra.mxu0 0.0
        %472 = vmatprep.subr.mxu0 0.0
        %473 = vmatpush2.msra.mxu0 0.0
        %474 = vmatprep.subr.mxu0 0.0
        %475 = vmatpush2.msra.mxu0 0.0
        %476 = vmatprep.subr.mxu0 0.0
        %477 = vmatpush2.msra.mxu0 0.0
        %478 = vmatprep.subr.mxu0 0.0
        %479 = vmatpush2.msra.mxu0 0.0
        %480 = vmatprep.subr.mxu0 0.0
        %481 = vmatpush2.msra.mxu0 0.0
        %482 = vmatprep.subr.mxu0 0.0
        %483 = vmatpush2.msra.mxu0 0.0
        %484 = vmatprep.subr.mxu0 0.0
        %485 = vmatpush2.msra.mxu0 0.0
        %486 = vmatprep.subr.mxu0 0.0
        %487 = vmatpush2.msra.mxu0 0.0
        %488 = vmatprep.subr.mxu0 0.0
        %489 = vmatpush2.msra.mxu0 0.0
        %490 = vmatprep.subr.mxu0 0.0
        %491 = vmatpush2.msra.mxu0 0.0
        %492 = vmatprep.subr.mxu0 0.0
        %493 = vmatpush2.msra.mxu0 0.0
        %494 = vmatprep.mubr.f32.mxu0 0.0
        %495 = vmatmul.mubr.f32.gmra.mxu0 %v406
        %v496 = vpop.f32.mrf.mxu0
        %v497 = vadd.f32 %v428, %v496
        %v498 = vpop.f32.mrf.mxu0
        %499 = vdwg.mxu0
        %v500 = vsub.f32 0.0, %v497
        %v501 = vmul.f32 %v500, 1.442695
        %v502 = vpow.pop %v501
        %v503 = vadd.f32 %v502, 1.0
        %v504 = vrcp.pop %v503
        %v505 = vld [vmem:[#allocation7] sm:$0xff]
        %v506 = vld [vmem:[#allocation7 + $0x8] sm:$0xff]
        %v507 = vld [vmem:[#allocation7 + $0x10] sm:$0xff]
        %v508 = vld [vmem:[#allocation7 + $0x18] sm:$0xff]
        %v509 = vld [vmem:[#allocation7 + $0x20] sm:$0xff]
        %v510 = vld [vmem:[#allocation7 + $0x28] sm:$0xff]
        %v511 = vld [vmem:[#allocation7 + $0x30] sm:$0xff]
        %v512 = vld [vmem:[#allocation7 + $0x38] sm:$0xff]
        %v513 = vld [vmem:[#allocation7 + $0x40] sm:$0xff]
        %v514 = vld [vmem:[#allocation7 + $0x48] sm:$0xff]
        %v515 = vld [vmem:[#allocation7 + $0x50] sm:$0xff]
        %v516 = vld [vmem:[#allocation7 + $0x58] sm:$0xff]
        %v517 = vld [vmem:[#allocation7 + $0x60] sm:$0xff]
        %v518 = vld [vmem:[#allocation7 + $0x68] sm:$0xff]
        %v519 = vld [vmem:[#allocation7 + $0x70] sm:$0xff]
        %v520 = vld [vmem:[#allocation7 + $0x78] sm:$0xff]
        %v521 = vld [vmem:[%s4] sm:$0x1]
        %v523 = vlaneseq
        %v524 = vshrl.u32 %v523, 7
        %v525 = vsub.s32 0, %v524
        %v526 = vrot.slane %v521, %v525
        %528 = vmatprep.subr.mxu0 0.0
        %529 = vmatpush1.msra.mxu0 %v520
        %530 = vmatprep.subr.mxu0 0.0
        %531 = vmatpush1.msra.mxu0 %v519
        %532 = vmatprep.subr.mxu0 0.0
        %533 = vmatpush1.msra.mxu0 %v518
        %534 = vmatprep.subr.mxu0 0.0
        %535 = vmatpush1.msra.mxu0 %v517
        %536 = vmatprep.subr.mxu0 0.0
        %537 = vmatpush1.msra.mxu0 %v516
        %538 = vmatprep.subr.mxu0 0.0
        %539 = vmatpush1.msra.mxu0 %v515
        %540 = vmatprep.subr.mxu0 0.0
        %541 = vmatpush1.msra.mxu0 %v514
        %542 = vmatprep.subr.mxu0 0.0
        %543 = vmatpush1.msra.mxu0 %v513
        %544 = vmatprep.subr.mxu0 0.0
        %545 = vmatpush1.msra.mxu0 %v512
        %546 = vmatprep.subr.mxu0 0.0
        %547 = vmatpush1.msra.mxu0 %v511
        %548 = vmatprep.subr.mxu0 0.0
        %549 = vmatpush1.msra.mxu0 %v510
        %550 = vmatprep.subr.mxu0 0.0
        %551 = vmatpush1.msra.mxu0 %v509
        %552 = vmatprep.subr.mxu0 0.0
        %553 = vmatpush1.msra.mxu0 %v508
        %554 = vmatprep.subr.mxu0 0.0
        %555 = vmatpush1.msra.mxu0 %v507
        %556 = vmatprep.subr.mxu0 0.0
        %557 = vmatpush1.msra.mxu0 %v506
        %558 = vmatprep.subr.mxu0 0.0
        %559 = vmatpush1.msra.mxu0 %v505
        %560 = vmatprep.subr.mxu0 0.0
        %561 = vmatpush2.msra.mxu0 0.0
        %562 = vmatprep.subr.mxu0 0.0
        %563 = vmatpush2.msra.mxu0 0.0
        %564 = vmatprep.subr.mxu0 0.0
        %565 = vmatpush2.msra.mxu0 0.0
        %566 = vmatprep.subr.mxu0 0.0
        %567 = vmatpush2.msra.mxu0 0.0
        %568 = vmatprep.subr.mxu0 0.0
        %569 = vmatpush2.msra.mxu0 0.0
        %570 = vmatprep.subr.mxu0 0.0
        %571 = vmatpush2.msra.mxu0 0.0
        %572 = vmatprep.subr.mxu0 0.0
        %573 = vmatpush2.msra.mxu0 0.0
        %574 = vmatprep.subr.mxu0 0.0
        %575 = vmatpush2.msra.mxu0 0.0
        %576 = vmatprep.subr.mxu0 0.0
        %577 = vmatpush2.msra.mxu0 0.0
        %578 = vmatprep.subr.mxu0 0.0
        %579 = vmatpush2.msra.mxu0 0.0
        %580 = vmatprep.subr.mxu0 0.0
        %581 = vmatpush2.msra.mxu0 0.0
        %582 = vmatprep.subr.mxu0 0.0
        %583 = vmatpush2.msra.mxu0 0.0
        %584 = vmatprep.subr.mxu0 0.0
        %585 = vmatpush2.msra.mxu0 0.0
        %586 = vmatprep.subr.mxu0 0.0
        %587 = vmatpush2.msra.mxu0 0.0
        %588 = vmatprep.subr.mxu0 0.0
        %589 = vmatpush2.msra.mxu0 0.0
        %590 = vmatprep.subr.mxu0 0.0
        %591 = vmatpush2.msra.mxu0 0.0
        %592 = vmatprep.mubr.f32.mxu0 0.0
        %593 = vmatmul.mubr.f32.gmra.mxu0 %v504
        %v594 = vpop.f32.mrf.mxu0
        %v595 = vadd.f32 %v526, %v594
        %v596 = vpop.f32.mrf.mxu0
        %597 = vdwg.mxu0
        %v598 = vsub.f32 0.0, %v595
        %v599 = vmul.f32 %v598, 1.442695
        %v600 = vpow.pop %v599
        %v601 = vadd.f32 %v600, 1.0
        %v602 = vrcp.pop %v601
        %v603 = vld [vmem:[#allocation8] sm:$0xff]
        %v604 = vld [vmem:[#allocation8 + $0x8] sm:$0xff]
        %v605 = vld [vmem:[#allocation8 + $0x10] sm:$0xff]
        %v606 = vld [vmem:[#allocation8 + $0x18] sm:$0xff]
        %v607 = vld [vmem:[#allocation8 + $0x20] sm:$0xff]
        %v608 = vld [vmem:[#allocation8 + $0x28] sm:$0xff]
        %v609 = vld [vmem:[#allocation8 + $0x30] sm:$0xff]
        %v610 = vld [vmem:[#allocation8 + $0x38] sm:$0xff]
        %v611 = vld [vmem:[#allocation8 + $0x40] sm:$0xff]
        %v612 = vld [vmem:[#allocation8 + $0x48] sm:$0xff]
        %v613 = vld [vmem:[#allocation8 + $0x50] sm:$0xff]
        %v614 = vld [vmem:[#allocation8 + $0x58] sm:$0xff]
        %v615 = vld [vmem:[#allocation8 + $0x60] sm:$0xff]
        %v616 = vld [vmem:[#allocation8 + $0x68] sm:$0xff]
        %v617 = vld [vmem:[#allocation8 + $0x70] sm:$0xff]
        %v618 = vld [vmem:[#allocation8 + $0x78] sm:$0xff]
        %v619 = vld [vmem:[#allocation8 + $0x80] sm:$0xff]
        %v620 = vld [vmem:[#allocation8 + $0x88] sm:$0xff]
        %v621 = vld [vmem:[#allocation8 + $0x90] sm:$0xff]
        %v622 = vld [vmem:[#allocation8 + $0x98] sm:$0xff]
        %v623 = vld [vmem:[#allocation8 + $0xa0] sm:$0xff]
        %v624 = vld [vmem:[#allocation8 + $0xa8] sm:$0xff]
        %v625 = vld [vmem:[#allocation8 + $0xb0] sm:$0xff]
        %v626 = vld [vmem:[#allocation8 + $0xb8] sm:$0xff]
        %v627 = vld [vmem:[#allocation8 + $0xc0] sm:$0xff]
        %v628 = vld [vmem:[#allocation8 + $0xc8] sm:$0xff]
        %v629 = vld [vmem:[#allocation8 + $0xd0] sm:$0xff]
        %v630 = vld [vmem:[#allocation8 + $0xd8] sm:$0xff]
        %v631 = vld [vmem:[#allocation8 + $0xe0] sm:$0xff]
        %v632 = vld [vmem:[#allocation8 + $0xe8] sm:$0xff]
        %v633 = vld [vmem:[#allocation8 + $0xf0] sm:$0xff]
        %v634 = vld [vmem:[#allocation8 + $0xf8] sm:$0xff]
        %v635 = vld [vmem:[%s6] sm:$0x3]
        %v637 = vlaneseq
        %v638 = vshrl.u32 %v637, 7
        %v639 = vsub.s32 0, %v638
        %v640 = vrot.slane %v635, %v639
        %v641 = vlaneseq
        %v642 = vshrl.u32 %v641, 7
        %v643 = vsub.s32 1, %v642
        %v644 = vrot.slane %v635, %v643
        %647 = vmatprep.subr.mxu0 %v634
        %648 = vmatpush1.msra.mxu0 %v633
        %649 = vmatprep.subr.mxu0 %v632
        %650 = vmatpush1.msra.mxu0 %v631
        %651 = vmatprep.subr.mxu0 %v630
        %652 = vmatpush1.msra.mxu0 %v629
        %653 = vmatprep.subr.mxu0 %v628
        %654 = vmatpush1.msra.mxu0 %v627
        %655 = vmatprep.subr.mxu0 %v626
        %656 = vmatpush1.msra.mxu0 %v625
        %657 = vmatprep.subr.mxu0 %v624
        %658 = vmatpush1.msra.mxu0 %v623
        %659 = vmatprep.subr.mxu0 %v622
        %660 = vmatpush1.msra.mxu0 %v621
        %661 = vmatprep.subr.mxu0 %v620
        %662 = vmatpush1.msra.mxu0 %v619
        %663 = vmatprep.subr.mxu0 %v618
        %664 = vmatpush1.msra.mxu0 %v617
        %665 = vmatprep.subr.mxu0 %v616
        %666 = vmatpush1.msra.mxu0 %v615
        %667 = vmatprep.subr.mxu0 %v614
        %668 = vmatpush1.msra.mxu0 %v613
        %669 = vmatprep.subr.mxu0 %v612
        %670 = vmatpush1.msra.mxu0 %v611
        %671 = vmatprep.subr.mxu0 %v610
        %672 = vmatpush1.msra.mxu0 %v609
        %673 = vmatprep.subr.mxu0 %v608
        %674 = vmatpush1.msra.mxu0 %v607
        %675 = vmatprep.subr.mxu0 %v606
        %676 = vmatpush1.msra.mxu0 %v605
        %677 = vmatprep.subr.mxu0 %v604
        %678 = vmatpush1.msra.mxu0 %v603
        %679 = vmatprep.subr.mxu0 0.0
        %680 = vmatpush2.msra.mxu0 0.0
        %681 = vmatprep.subr.mxu0 0.0
        %682 = vmatpush2.msra.mxu0 0.0
        %683 = vmatprep.subr.mxu0 0.0
        %684 = vmatpush2.msra.mxu0 0.0
        %685 = vmatprep.subr.mxu0 0.0
        %686 = vmatpush2.msra.mxu0 0.0
        %687 = vmatprep.subr.mxu0 0.0
        %688 = vmatpush2.msra.mxu0 0.0
        %689 = vmatprep.subr.mxu0 0.0
        %690 = vmatpush2.msra.mxu0 0.0
        %691 = vmatprep.subr.mxu0 0.0
        %692 = vmatpush2.msra.mxu0 0.0
        %693 = vmatprep.subr.mxu0 0.0
        %694 = vmatpush2.msra.mxu0 0.0
        %695 = vmatprep.subr.mxu0 0.0
        %696 = vmatpush2.msra.mxu0 0.0
        %697 = vmatprep.subr.mxu0 0.0
        %698 = vmatpush2.msra.mxu0 0.0
        %699 = vmatprep.subr.mxu0 0.0
        %700 = vmatpush2.msra.mxu0 0.0
        %701 = vmatprep.subr.mxu0 0.0
        %702 = vmatpush2.msra.mxu0 0.0
        %703 = vmatprep.subr.mxu0 0.0
        %704 = vmatpush2.msra.mxu0 0.0
        %705 = vmatprep.subr.mxu0 0.0
        %706 = vmatpush2.msra.mxu0 0.0
        %707 = vmatprep.subr.mxu0 0.0
        %708 = vmatpush2.msra.mxu0 0.0
        %709 = vmatprep.subr.mxu0 0.0
        %710 = vmatpush2.msra.mxu0 0.0
        %711 = vmatprep.mubr.f32.mxu0 0.0
        %712 = vmatmul.mubr.f32.gmra.mxu0 %v602
        %v713 = vpop.f32.mrf.mxu0
        %v714 = vadd.f32 %v640, %v713
        %v715 = vpop.f32.mrf.mxu0
        %v716 = vadd.f32 %v644, %v715
        %717 = vdwg.mxu0
        %v718 = vsub.f32 0.0, %v714
        %v719 = vsub.f32 0.0, %v716
        %v720 = vmul.f32 %v718, 1.442695
        %v721 = vpow.pop %v720
        %v722 = vmul.f32 %v719, 1.442695
        %v723 = vpow.pop %v722
        %v724 = vadd.f32 %v721, 1.0
        %v725 = vadd.f32 %v723, 1.0
        %v726 = vrcp.pop %v724
        %v727 = vrcp.pop %v725
        %v728 = vld [vmem:[#allocation10] sm:$0xff]
        %v729 = vld [vmem:[#allocation10 + $0x8] sm:$0xff]
        %v730 = vld [vmem:[#allocation10 + $0x10] sm:$0xff]
        %v731 = vld [vmem:[#allocation10 + $0x18] sm:$0xff]
        %v732 = vld [vmem:[#allocation10 + $0x20] sm:$0xff]
        %v733 = vld [vmem:[#allocation10 + $0x28] sm:$0xff]
        %v734 = vld [vmem:[#allocation10 + $0x30] sm:$0xff]
        %v735 = vld [vmem:[#allocation10 + $0x38] sm:$0xff]
        %v736 = vld [vmem:[#allocation10 + $0x40] sm:$0xff]
        %v737 = vld [vmem:[#allocation10 + $0x48] sm:$0xff]
        %v738 = vld [vmem:[#allocation10 + $0x50] sm:$0xff]
        %v739 = vld [vmem:[#allocation10 + $0x58] sm:$0xff]
        %v740 = vld [vmem:[#allocation10 + $0x60] sm:$0xff]
        %v741 = vld [vmem:[#allocation10 + $0x68] sm:$0xff]
        %v742 = vld [vmem:[#allocation10 + $0x70] sm:$0xff]
        %v743 = vld [vmem:[#allocation10 + $0x78] sm:$0xff]
        %v744 = vld [vmem:[#allocation10 + $0x80] sm:$0xff]
        %v745 = vld [vmem:[#allocation10 + $0x88] sm:$0xff]
        %v746 = vld [vmem:[#allocation10 + $0x90] sm:$0xff]
        %v747 = vld [vmem:[#allocation10 + $0x98] sm:$0xff]
        %v748 = vld [vmem:[#allocation10 + $0xa0] sm:$0xff]
        %v749 = vld [vmem:[#allocation10 + $0xa8] sm:$0xff]
        %v750 = vld [vmem:[#allocation10 + $0xb0] sm:$0xff]
        %v751 = vld [vmem:[#allocation10 + $0xb8] sm:$0xff]
        %v752 = vld [vmem:[#allocation10 + $0xc0] sm:$0xff]
        %v753 = vld [vmem:[#allocation10 + $0xc8] sm:$0xff]
        %v754 = vld [vmem:[#allocation10 + $0xd0] sm:$0xff]
        %v755 = vld [vmem:[#allocation10 + $0xd8] sm:$0xff]
        %v756 = vld [vmem:[#allocation10 + $0xe0] sm:$0xff]
        %v757 = vld [vmem:[#allocation10 + $0xe8] sm:$0xff]
        %v758 = vld [vmem:[#allocation10 + $0xf0] sm:$0xff]
        %v759 = vld [vmem:[#allocation10 + $0xf8] sm:$0xff]
        %v760 = vld [vmem:[%s8] sm:$0x1]
        %v762 = vlaneseq
        %v763 = vshrl.u32 %v762, 7
        %v764 = vsub.s32 0, %v763
        %v765 = vrot.slane %v760, %v764
        %767 = vmatprep.subr.mxu0 0.0
        %768 = vmatpush1.msra.mxu0 %v743
        %769 = vmatprep.subr.mxu0 0.0
        %770 = vmatpush1.msra.mxu0 %v742
        %771 = vmatprep.subr.mxu0 0.0
        %772 = vmatpush1.msra.mxu0 %v741
        %773 = vmatprep.subr.mxu0 0.0
        %774 = vmatpush1.msra.mxu0 %v740
        %775 = vmatprep.subr.mxu0 0.0
        %776 = vmatpush1.msra.mxu0 %v739
        %777 = vmatprep.subr.mxu0 0.0
        %778 = vmatpush1.msra.mxu0 %v738
        %779 = vmatprep.subr.mxu0 0.0
        %780 = vmatpush1.msra.mxu0 %v737
        %781 = vmatprep.subr.mxu0 0.0
        %782 = vmatpush1.msra.mxu0 %v736
        %783 = vmatprep.subr.mxu0 0.0
        %784 = vmatpush1.msra.mxu0 %v735
        %785 = vmatprep.subr.mxu0 0.0
        %786 = vmatpush1.msra.mxu0 %v734
        %787 = vmatprep.subr.mxu0 0.0
        %788 = vmatpush1.msra.mxu0 %v733
        %789 = vmatprep.subr.mxu0 0.0
        %790 = vmatpush1.msra.mxu0 %v732
        %791 = vmatprep.subr.mxu0 0.0
        %792 = vmatpush1.msra.mxu0 %v731
        %793 = vmatprep.subr.mxu0 0.0
        %794 = vmatpush1.msra.mxu0 %v730
        %795 = vmatprep.subr.mxu0 0.0
        %796 = vmatpush1.msra.mxu0 %v729
        %797 = vmatprep.subr.mxu0 0.0
        %798 = vmatpush1.msra.mxu0 %v728
        %799 = vmatprep.subr.mxu0 0.0
        %800 = vmatpush2.msra.mxu0 %v759
        %801 = vmatprep.subr.mxu0 0.0
        %802 = vmatpush2.msra.mxu0 %v758
        %803 = vmatprep.subr.mxu0 0.0
        %804 = vmatpush2.msra.mxu0 %v757
        %805 = vmatprep.subr.mxu0 0.0
        %806 = vmatpush2.msra.mxu0 %v756
        %807 = vmatprep.subr.mxu0 0.0
        %808 = vmatpush2.msra.mxu0 %v755
        %809 = vmatprep.subr.mxu0 0.0
        %810 = vmatpush2.msra.mxu0 %v754
        %811 = vmatprep.subr.mxu0 0.0
        %812 = vmatpush2.msra.mxu0 %v753
        %813 = vmatprep.subr.mxu0 0.0
        %814 = vmatpush2.msra.mxu0 %v752
        %815 = vmatprep.subr.mxu0 0.0
        %816 = vmatpush2.msra.mxu0 %v751
        %817 = vmatprep.subr.mxu0 0.0
        %818 = vmatpush2.msra.mxu0 %v750
        %819 = vmatprep.subr.mxu0 0.0
        %820 = vmatpush2.msra.mxu0 %v749
        %821 = vmatprep.subr.mxu0 0.0
        %822 = vmatpush2.msra.mxu0 %v748
        %823 = vmatprep.subr.mxu0 0.0
        %824 = vmatpush2.msra.mxu0 %v747
        %825 = vmatprep.subr.mxu0 0.0
        %826 = vmatpush2.msra.mxu0 %v746
        %827 = vmatprep.subr.mxu0 0.0
        %828 = vmatpush2.msra.mxu0 %v745
        %829 = vmatprep.subr.mxu0 0.0
        %830 = vmatpush2.msra.mxu0 %v744
        %831 = vmatprep.mubr.f32.mxu0 %v727
        %832 = vmatmul.mubr.f32.gmra.mxu0 %v726
        %v833 = vpop.f32.mrf.mxu0
        %v834 = vadd.f32 %v765, %v833
        %v835 = vpop.f32.mrf.mxu0
        %836 = vdwg.mxu0
        %v837 = vsub.f32 0.0, %v834
        %v838 = vmul.f32 %v837, 1.442695
        %v839 = vpow.pop %v838
        %v840 = vadd.f32 %v839, 1.0
        %v841 = vrcp.pop %v840
        %842 = vst [vmem:[%s405] sm:$0xff] %v841
        %s843 = sand.u32 %s230, 1
        %s844 = scalar_lea.sflag [#allocation4], %s843
        %s845 = sand.u32 %s230, 1
        %s846 = smul.addr %s845, 8
        %s847 = scalar_lea.vmem [#allocation11], %s846
        // Predicated region
        $region77: #{tpu_custom_call.1} parent=55 // pred_check
          %p848 = pneg %p240
        $region78: #{tpu_custom_call.1} parent=55 // pred_check_branch
          %850 = sbr.rel (%p848) target = $region80
        $region79: #{tpu_custom_call.1} parent=55 // pred_region
          %s852 = ssub.s32 128, 128
          %853 = vsyncadd %s844, %s852
          %s854 = smul.addr %s28, 128
          %s855 = scalar_lea.hbm %s9, %s854
          %s857 = sshll.u32 %s847, 4
          %s858 = int_to_ptr.vmem [resolvable:$true] %s857
          %860 = dma.vmem_to_hbm [thread:$0]  %s858, 128, %s855, %s844
        $region80: #{tpu_custom_call.1} parent=55 // pred_fallthru
          _
      $region56: #{tpu_custom_call.1} parent=5 // pred_fallthru
        _
      %p861 = scmp.le.s32.totalorder 2, %s23
      // Predicated region
      $region81: #{tpu_custom_call.1} parent=5 // pred_check
        %p862 = pneg %p861
      $region82: #{tpu_custom_call.1} parent=5 // pred_check_branch
        %864 = sbr.rel (%p862) target = $region84
      $region83: #{tpu_custom_call.1} parent=5 // pred_region
        %s865 = ssub.s32 %s23, 2
        // Predicated region
        $region85: #{tpu_custom_call.1} parent=83 // pred_check
          %p866 = pneg %p246
        $region86: #{tpu_custom_call.1} parent=83 // pred_check_branch
          %868 = sbr.rel (%p866) target = $region88
        $region87: #{tpu_custom_call.1} parent=83 // pred_region
          %s869 = sand.u32 %s231, 1
          %s870 = scalar_lea.sflag [#allocation4], %s869
          %s871 = sand.u32 %s231, 1
          %s872 = smul.addr %s871, 8
          %s873 = scalar_lea.vmem [#allocation11], %s872
          %874 = dma.done %s870, 128
        $region88: #{tpu_custom_call.1} parent=83 // pred_fallthru
          _
      $region84: #{tpu_custom_call.1} parent=5 // pred_fallthru
        _
    $region6: #{tpu_custom_call.1} parent=1 // loop_footer
      %s27 = sadd.s32 1, %s23
    $region7: #{tpu_custom_call.1} parent=1 // loop_footer_branch
      %22 = sbr.rel target = $region3
    $region8: #{tpu_custom_call.1} parent=1 // loop_exit
      _
    %875 = vsyncpa [#allocation3], 1
    %s876 = scalar_lea.sflag [#allocation3], 1
    %877 = vsyncpa %s876, 1
    %878 = vsyncpa [#allocation6], 1
    %879 = vsyncpa [#allocation9], 1
    %880 = vsyncpa [#allocation4], 1
    %s881 = scalar_lea.sflag [#allocation4], 1
    %882 = vsyncpa %s881, 1

</llo_original>
